<compile_context>
chip_gen: v5e
topology: v5e:2x2
jax: 0.10.0
libtpu: 0.0.40
codegen_flags: <defaults>
</compile_context>

<pallas_src>
import functools

import jax
import jax.numpy as jnp
from jax import lax
from jax.experimental import pallas as pl
from jax.experimental.pallas import tpu as pltpu

LANE = 128


def _cdiv(a, b):
    return -(-a // b)


def _device_kind():
    try:
        return jax.devices()[0].device_kind.lower()
    except Exception:
        return ""


def _default_block_rows():
    # ~0.35us per-step overhead: v7x's ~3.2TB/s/TC HBM wants ~4MiB input blocks
    # to stay >=90% of roofline; v5e/v6e are already >=93% at 4096 rows and
    # v5e's 16MiB scoped-VMEM default prefers the smaller tile.
    return 8192 if "7" in _device_kind() else 4096


def _default_num_partials():
    # Only v7x-class chips have 2 TensorCores; on 1-TC chips a "parallel"
    # split is just a serial loop split that triggers the ragged mask.
    return 2 if "7" in _device_kind() else 1


def _wmse_kernel(pred_ref, target_ref, weights_ref,     # inputs  (tr, 128)
                 sums_ref, ints_ref,                     # outputs (partials)
                 acc_sm, acc_cp, acc_nz,                 # (8,128) accumulators
                 *, rows, n_blocks, need_mask):
    """Streaming partial reduction.

    Grid is (n_par, n_seq): axis 0 "parallel" (per-slice partials), axis 1 the
    carried "arbitrary" reduction axis.  Per parallel slice p:
      sums_ref[p, 0, :] = sum(scale where weights > 0)   (f32, per lane)
      ints_ref[p, 0, :] = count(weights > 0)             (int32, exact)
      ints_ref[p, 1, :] = any(scale != 0) flag           (int32 0/1)
    """
    tr, lane = pred_ref.shape
    acc_rows = acc_sm.shape[0]
    s_idx = pl.program_id(1)
    n_seq = pl.num_programs(1)

    @pl.when(s_idx == 0)
    def _():
        acc_sm[...] = jnp.zeros_like(acc_sm)
        acc_cp[...] = jnp.zeros_like(acc_cp)
        acc_nz[...] = jnp.zeros_like(acc_nz)

    # Cast to f32 in-kernel (f32 math even for bf16 inputs, HBM traffic stays
    # at the native dtype width).
    p = pred_ref[...].astype(jnp.float32)
    t = target_ref[...].astype(jnp.float32)
    w = weights_ref[...].astype(jnp.float32)
    diff = p - t
    scale = w * diff * diff
    pos = w > 0

    # Fold a (tr,128) block down to one (acc_rows,128) vreg-aligned partial
    # with pure VALU vreg adds / maxes (no per-step XLU reduce, no large
    # accumulator VMEM traffic).
    def fold_sum(x):
        if acc_rows == tr:
            return x
        return x.reshape(tr // acc_rows, acc_rows, lane).sum(axis=0)

    def fold_max(x):
        if acc_rows == tr:
            return x
        return x.reshape(tr // acc_rows, acc_rows, lane).max(axis=0)

    def accumulate(pos_mask, nz_mask):
        acc_sm[...] += fold_sum(jnp.where(pos_mask, scale, 0.0))
        acc_cp[...] += fold_sum(pos_mask.astype(jnp.int32))
        acc_nz[...] = jnp.maximum(acc_nz[...], fold_max(nz_mask.astype(jnp.int32)))

    if need_mask:
        block_lin = pl.program_id(0) * n_seq + s_idx
        is_edge = block_lin >= (n_blocks - 1)

        # Steady-state blocks: unmasked fast path.
        @pl.when(jnp.logical_not(is_edge))
        def _():
            accumulate(pos, scale != 0)

        # Last real block (row-ragged) and clamped overrun blocks: mask rows
        # that fall past the real array.
        @pl.when(is_edge)
        def _():
            row_ids = lax.broadcasted_iota(jnp.int32, (tr, lane), 0)
            valid = (block_lin * tr + row_ids) < rows
            accumulate(jnp.logical_and(pos, valid),
                       jnp.logical_and(scale != 0, valid))
    else:
        accumulate(pos, scale != 0)

    @pl.when(s_idx == n_seq - 1)
    def _():
        # One tiny sublane reduce per quantity per parallel slice; the
        # cross-lane combine happens (trivially) in the wrapper.
        sums_ref[0, 0:1, :] = jnp.sum(acc_sm[...], axis=0, keepdims=True)
        ints_ref[0, 0:1, :] = jnp.sum(acc_cp[...], axis=0, keepdims=True)
        ints_ref[0, 1:2, :] = jnp.max(acc_nz[...], axis=0, keepdims=True)


def weighted_mse_loss(pred, target, weights, *, block_rows=None,
                      num_partials=None):
    """Pallas implementation of WeightedMSELoss.forward."""
    assert pred.shape == target.shape == weights.shape
    total_n = int(pred.size)

    rows = total_n // LANE
    rem = total_n - rows * LANE

    # ---- <128-element lane tail: tiny pure-JAX contribution (no jnp.pad) ---
    if rem:
        def tail_of(x):
            return jnp.ravel(x)[rows * LANE:].astype(jnp.float32)
        tp, tt, tw = tail_of(pred), tail_of(target), tail_of(weights)
        td = tp - tt
        ts = tw * td * td
        tpos = tw > 0
        tail_sum = jnp.sum(jnp.where(tpos, ts, 0.0))
        tail_cnt = jnp.sum(tpos.astype(jnp.int32))
        tail_any = jnp.any(ts != 0)
    else:
        tail_sum = jnp.float32(0.0)
        tail_cnt = jnp.int32(0)
        tail_any = False

    # ---- main 128-aligned part: Pallas streaming reduction -----------------
    if rows == 0:
        k_sum = jnp.float32(0.0)
        k_cnt = jnp.int32(0)
        k_any = False
    else:
        def main_of(x):
            flat = jnp.ravel(x)                    # free reshape (contiguous)
            if rem:
                flat = flat[: rows * LANE]         # copy only in the rare ragged case
            return flat.reshape(rows, LANE)

        p2, t2, w2 = main_of(pred), main_of(target), main_of(weights)

        if block_rows is None:
            block_rows = _default_block_rows()
        if num_partials is None:
            num_partials = _default_num_partials()

        tr = min(block_rows, rows)
        if tr % 8 and tr != rows:
            tr = max(8, tr - tr % 8)               # keep (8,128) divisibility
        n_blocks = _cdiv(rows, tr)
        n_par = max(1, min(num_partials, n_blocks))
        n_seq = _cdiv(n_blocks, n_par)
        need_mask = (rows % tr != 0) or (n_blocks % n_par != 0)
        acc_rows = 8 if tr % 8 == 0 else tr

        def in_map(pi, si):
            # Clamp so the (rare) overrun blocks of the parallel split stay in
            # bounds; their contribution is zeroed by the in-kernel row mask.
            return (jnp.minimum(pi * n_seq + si, n_blocks - 1), 0)

        def out_map(pi, si):
            return (pi, 0, 0)

        kernel = functools.partial(_wmse_kernel, rows=rows, n_blocks=n_blocks,
                                   need_mask=need_mask)

        # Double-buffered input bytes; raise the scoped-VMEM limit only if the
        # chosen tile actually needs it (e.g. 8192-row blocks on v7x).
        in_bytes = 2 * tr * LANE * (p2.dtype.itemsize + t2.dtype.itemsize
                                    + w2.dtype.itemsize)
        cp_kwargs = dict(dimension_semantics=("parallel", "arbitrary"))
        if in_bytes > (14 << 20):
            cp_kwargs["vmem_limit_bytes"] = int(in_bytes + (8 << 20))

        sums, ints = pl.pallas_call(
            kernel,
            out_shape=(
                jax.ShapeDtypeStruct((n_par, 1, LANE), jnp.float32),
                jax.ShapeDtypeStruct((n_par, 2, LANE), jnp.int32),
            ),
            grid_spec=pltpu.PrefetchScalarGridSpec(
                num_scalar_prefetch=0,
                grid=(n_par, n_seq),
                in_specs=[
                    pl.BlockSpec((tr, LANE), in_map),
                    pl.BlockSpec((tr, LANE), in_map),
                    pl.BlockSpec((tr, LANE), in_map),
                ],
                out_specs=(
                    pl.BlockSpec((1, 1, LANE), out_map),
                    pl.BlockSpec((1, 2, LANE), out_map),
                ),
                scratch_shapes=[
                    pltpu.VMEM((acc_rows, LANE), jnp.float32),  # sum(scale|w>0)
                    pltpu.VMEM((acc_rows, LANE), jnp.int32),    # count(w>0)
                    pltpu.VMEM((acc_rows, LANE), jnp.int32),    # any(scale!=0)
                ],
            ),
            compiler_params=pltpu.CompilerParams(**cp_kwargs),
        )(p2, t2, w2)

        k_sum = jnp.sum(sums[:, 0, :])
        # int32 is exact up to 2**31-1 selected elements (>= 8 GiB of f32 per
        # input), so overflow here is purely theoretical at feasible sizes.
        k_cnt = jnp.sum(ints[:, 0, :])
        k_any = jnp.max(ints[:, 1, :]) > 0

    sum_masked = k_sum + tail_sum
    cnt_pos = (k_cnt + tail_cnt).astype(jnp.float32)
    any_nz = jnp.logical_or(k_any, tail_any)
    # Masked branch: mean over selected elements (0/0 -> NaN, matching
    # torch.mean of an empty masked_select).  Fallback branch: when
    # count_nonzero(scale)==0 every scale element is exactly 0, so
    # mean(scale) == 0 exactly.
    return jnp.where(any_nz, sum_masked / cnt_pos, jnp.float32(0.0))


def _reference(pred, target, weights):
    """Pure-JAX reference mirroring the PyTorch module."""
    scale = weights * (pred - target) ** 2
    nnz = jnp.count_nonzero(scale)
    pos = weights > 0
    masked_mean = jnp.sum(jnp.where(pos, scale, 0.0)) / jnp.sum(pos)
    return jnp.where(nnz != 0, masked_mean, jnp.mean(scale))


def _check(loss, ref, tag):
    assert jnp.allclose(loss, ref, rtol=1e-5, atol=1e-6), (tag, loss, ref)


if __name__ == "__main__":
    # WeightedMSELoss has no parameters; just build deterministic inputs.
    key = jax.random.PRNGKey(0)
    k1, k2, k3, k4 = jax.random.split(key, 4)

    # --- main test: NCHW shape from the surrounding conv model --------------
    shape = (2, 4, 16, 16)
    pred = jax.random.normal(k1, shape, dtype=jnp.float32)
    target = jax.random.normal(k2, shape, dtype=jnp.float32)
    weights = (jax.random.uniform(k3, shape, dtype=jnp.float32) > 0.5).astype(
        jnp.float32
    ) * 2.0

    loss = jax.block_until_ready(weighted_mse_loss(pred, target, weights))
    _check(loss, _reference(pred, target, weights), "default")

    # --- multi-block / 2-way parallel partials (small block to exercise it) -
    loss_p = jax.block_until_ready(
        weighted_mse_loss(pred, target, weights, block_rows=8, num_partials=2)
    )
    _check(loss_p, _reference(pred, target, weights), "parallel")

    # --- carried accumulation across the sequential axis (n_seq > 1) --------
    shape2 = (2, 4, 32, 16)
    p2 = jax.random.normal(k1, shape2, dtype=jnp.float32)
    t2 = jax.random.normal(k2, shape2, dtype=jnp.float32)
    w2 = jax.random.uniform(k3, shape2, dtype=jnp.float32) - 0.3  # some w <= 0
    loss_s = jax.block_until_ready(
        weighted_mse_loss(p2, t2, w2, block_rows=8, num_partials=2)
    )
    _check(loss_s, _reference(p2, t2, w2), "sequential")

    # --- ragged lane tail (total_n not a multiple of 128) -------------------
    shape3 = (2, 3, 10, 10)
    p3 = jax.random.normal(k1, shape3, dtype=jnp.float32)
    t3 = jax.random.normal(k2, shape3, dtype=jnp.float32)
    w3 = (jax.random.uniform(k4, shape3, dtype=jnp.float32) > 0.4).astype(
        jnp.float32
    )
    loss_r = jax.block_until_ready(weighted_mse_loss(p3, t3, w3))
    _check(loss_r, _reference(p3, t3, w3), "lane-ragged")

    # --- ragged row blocks (edge-gated in-kernel validity mask) -------------
    shape4 = (2, 3, 16, 16)
    p4 = jax.random.normal(k1, shape4, dtype=jnp.float32)
    t4 = jax.random.normal(k2, shape4, dtype=jnp.float32)
    w4 = (jax.random.uniform(k4, shape4, dtype=jnp.float32) > 0.5).astype(
        jnp.float32
    )
    loss_m = jax.block_until_ready(
        weighted_mse_loss(p4, t4, w4, block_rows=8, num_partials=2)
    )
    _check(loss_m, _reference(p4, t4, w4), "row-masked")

    # --- ragged rows + clamped overrun block on the parallel split ----------
    shape5 = (4, 5, 128)
    p5 = jax.random.normal(k1, shape5, dtype=jnp.float32)
    t5 = jax.random.normal(k2, shape5, dtype=jnp.float32)
    w5 = jax.random.uniform(k4, shape5, dtype=jnp.float32) - 0.4
    loss_o = jax.block_until_ready(
        weighted_mse_loss(p5, t5, w5, block_rows=8, num_partials=2)
    )
    _check(loss_o, _reference(p5, t5, w5), "overrun")

    # --- fallback branch (all-zero scale) ------------------------------------
    loss0 = jax.block_until_ready(
        weighted_mse_loss(pred, pred, jnp.zeros(shape, jnp.float32))
    )
    assert jnp.allclose(loss0, 0.0), loss0

    print("KERNEL_OK")
</pallas_src>

<mosaic_0001>
module attributes {stable_mosaic.version = 11 : i64} {
  func.func @_wmse_kernel(%arg0: i32, %arg1: i32, %arg2: memref<16x128xf32, #tpu.memory_space<vmem>>, %arg3: memref<16x128xf32, #tpu.memory_space<vmem>>, %arg4: memref<16x128xf32, #tpu.memory_space<vmem>>, %arg5: memref<1x1x128xf32, #tpu.memory_space<vmem>>, %arg6: memref<1x2x128xi32, #tpu.memory_space<vmem>>, %arg7: memref<8x128xf32, #tpu.memory_space<vmem>>, %arg8: memref<8x128xi32, #tpu.memory_space<vmem>>, %arg9: memref<8x128xi32, #tpu.memory_space<vmem>>) attributes {dimension_semantics = [#tpu.dimension_semantics<parallel>, #tpu.dimension_semantics<arbitrary>], iteration_bounds = array<i64: 1, 1>, scalar_prefetch = 0 : i64, scratch_operands = 3 : i64, tpu.core_type = #tpu.core_type<tc>, window_params = [{transform_indices = @transform_0, window_bounds = array<i64: 16, 128>}, {transform_indices = @transform_1, window_bounds = array<i64: 16, 128>}, {transform_indices = @transform_2, window_bounds = array<i64: 16, 128>}, {transform_indices = @transform_3, window_bounds = array<i64: 1, 1, 128>}, {transform_indices = @transform_4, window_bounds = array<i64: 1, 2, 128>}]} {
    %c0_i32 = arith.constant 0 : i32
    %0 = arith.cmpi eq, %arg1, %c0_i32 : i32
    %1 = arith.extui %0 : i1 to i32
    %c0_i32_0 = arith.constant 0 : i32
    %2 = arith.cmpi ne, %1, %c0_i32_0 : i32
    scf.if %2 {
      %cst_25 = arith.constant 0.000000e+00 : f32
      %35 = vector.broadcast %cst_25 : f32 to vector<8x128xf32>
      %c0_26 = arith.constant 0 : index
      %c0_27 = arith.constant 0 : index
      %36 = vector.load %arg7[%c0_26, %c0_27] : memref<8x128xf32, #tpu.memory_space<vmem>>, vector<8x128xf32>
      tpu.vector_store %arg7[%c0_26, %c0_27], %35 {strides = array<i32>} : memref<8x128xf32, #tpu.memory_space<vmem>>, vector<8x128xf32>,
      %c0_i32_28 = arith.constant 0 : i32
      %37 = vector.broadcast %c0_i32_28 : i32 to vector<8x128xi32>
      %c0_29 = arith.constant 0 : index
      %c0_30 = arith.constant 0 : index
      %38 = vector.load %arg8[%c0_29, %c0_30] : memref<8x128xi32, #tpu.memory_space<vmem>>, vector<8x128xi32>
      tpu.vector_store %arg8[%c0_29, %c0_30], %37 {strides = array<i32>} : memref<8x128xi32, #tpu.memory_space<vmem>>, vector<8x128xi32>,
      %c0_i32_31 = arith.constant 0 : i32
      %39 = vector.broadcast %c0_i32_31 : i32 to vector<8x128xi32>
      %c0_32 = arith.constant 0 : index
      %c0_33 = arith.constant 0 : index
      %40 = vector.load %arg9[%c0_32, %c0_33] : memref<8x128xi32, #tpu.memory_space<vmem>>, vector<8x128xi32>
      tpu.vector_store %arg9[%c0_32, %c0_33], %39 {strides = array<i32>} : memref<8x128xi32, #tpu.memory_space<vmem>>, vector<8x128xi32>,
    } else {
    }
    %c0 = arith.constant 0 : index
    %c0_1 = arith.constant 0 : index
    %3 = vector.load %arg2[%c0, %c0_1] : memref<16x128xf32, #tpu.memory_space<vmem>>, vector<16x128xf32>
    %c0_2 = arith.constant 0 : index
    %c0_3 = arith.constant 0 : index
    %4 = vector.load %arg3[%c0_2, %c0_3] : memref<16x128xf32, #tpu.memory_space<vmem>>, vector<16x128xf32>
    %c0_4 = arith.constant 0 : index
    %c0_5 = arith.constant 0 : index
    %5 = vector.load %arg4[%c0_4, %c0_5] : memref<16x128xf32, #tpu.memory_space<vmem>>, vector<16x128xf32>
    %6 = arith.subf %3, %4 : vector<16x128xf32>
    %7 = arith.mulf %5, %6 : vector<16x128xf32>
    %8 = arith.mulf %7, %6 : vector<16x128xf32>
    %cst = arith.constant 0.000000e+00 : f32
    %9 = vector.broadcast %cst : f32 to vector<16x128xf32>
    %10 = arith.cmpf ogt, %5, %9 : vector<16x128xf32>
    %cst_6 = arith.constant 0.000000e+00 : f32
    %11 = vector.broadcast %cst_6 : f32 to vector<16x128xf32>
    %12 = arith.cmpf one, %8, %11 : vector<16x128xf32>
    %c0_7 = arith.constant 0 : index
    %c0_8 = arith.constant 0 : index
    %13 = vector.load %arg7[%c0_7, %c0_8] : memref<8x128xf32, #tpu.memory_space<vmem>>, vector<8x128xf32>
    %cst_9 = arith.constant 0.000000e+00 : f32
    %14 = vector.broadcast %cst_9 : f32 to vector<16x128xf32>
    %15 = arith.select %10, %8, %14 : vector<16x128xi1>, vector<16x128xf32>
    %16 = vector.shape_cast %15 : vector<16x128xf32> to vector<2x8x128xf32>
    %cst_10 = arith.constant dense<0.000000e+00> : vector<8x128xf32>
    %17 = vector.multi_reduction <add>, %16, %cst_10 [0] : vector<2x8x128xf32> to vector<8x128xf32>
    %18 = arith.addf %13, %17 : vector<8x128xf32>
    %c0_11 = arith.constant 0 : index
    %c0_12 = arith.constant 0 : index
    %19 = vector.load %arg7[%c0_11, %c0_12] : memref<8x128xf32, #tpu.memory_space<vmem>>, vector<8x128xf32>
    tpu.vector_store %arg7[%c0_11, %c0_12], %18 {strides = array<i32>} : memref<8x128xf32, #tpu.memory_space<vmem>>, vector<8x128xf32>,
    %c0_13 = arith.constant 0 : index
    %c0_14 = arith.constant 0 : index
    %20 = vector.load %arg8[%c0_13, %c0_14] : memref<8x128xi32, #tpu.memory_space<vmem>>, vector<8x128xi32>
    %21 = arith.extui %10 : vector<16x128xi1> to vector<16x128xi32>
    %22 = vector.shape_cast %21 : vector<16x128xi32> to vector<2x8x128xi32>
    %cst_15 = arith.constant dense<0> : vector<8x128xi32>
    %23 = vector.multi_reduction <add>, %22, %cst_15 [0] : vector<2x8x128xi32> to vector<8x128xi32>
    %24 = arith.addi %20, %23 : vector<8x128xi32>
    %c0_16 = arith.constant 0 : index
    %c0_17 = arith.constant 0 : index
    %25 = vector.load %arg8[%c0_16, %c0_17] : memref<8x128xi32, #tpu.memory_space<vmem>>, vector<8x128xi32>
    tpu.vector_store %arg8[%c0_16, %c0_17], %24 {strides = array<i32>} : memref<8x128xi32, #tpu.memory_space<vmem>>, vector<8x128xi32>,
    %c0_18 = arith.constant 0 : index
    %c0_19 = arith.constant 0 : index
    %26 = vector.load %arg9[%c0_18, %c0_19] : memref<8x128xi32, #tpu.memory_space<vmem>>, vector<8x128xi32>
    %27 = arith.extui %12 : vector<16x128xi1> to vector<16x128xi32>
    %28 = vector.shape_cast %27 : vector<16x128xi32> to vector<2x8x128xi32>
    %cst_20 = arith.constant dense<-2147483648> : vector<8x128xi32>
    %29 = vector.multi_reduction <maxsi>, %28, %cst_20 [0] : vector<2x8x128xi32> to vector<8x128xi32>
    %30 = arith.maxsi %26, %29 : vector<8x128xi32>
    %c0_21 = arith.constant 0 : index
    %c0_22 = arith.constant 0 : index
    %31 = vector.load %arg9[%c0_21, %c0_22] : memref<8x128xi32, #tpu.memory_space<vmem>>, vector<8x128xi32>
    tpu.vector_store %arg9[%c0_21, %c0_22], %30 {strides = array<i32>} : memref<8x128xi32, #tpu.memory_space<vmem>>, vector<8x128xi32>,
    %c0_i32_23 = arith.constant 0 : i32
    %32 = arith.cmpi eq, %arg1, %c0_i32_23 : i32
    %33 = arith.extui %32 : i1 to i32
    %c0_i32_24 = arith.constant 0 : i32
    %34 = arith.cmpi ne, %33, %c0_i32_24 : i32
    scf.if %34 {
      %c0_25 = arith.constant 0 : index
      %c0_26 = arith.constant 0 : index
      %35 = vector.load %arg7[%c0_25, %c0_26] : memref<8x128xf32, #tpu.memory_space<vmem>>, vector<8x128xf32>
      %cst_27 = arith.constant dense<0.000000e+00> : vector<128xf32>
      %36 = vector.multi_reduction <add>, %35, %cst_27 [0] : vector<8x128xf32> to vector<128xf32>
      %37 = vector.shape_cast %36 : vector<128xf32> to vector<1x128xf32>
      %c0_28 = arith.constant 0 : index
      %c0_29 = arith.constant 0 : index
      %c0_30 = arith.constant 0 : index
      %38 = vector.load %arg5[%c0_28, %c0_29, %c0_30] : memref<1x1x128xf32, #tpu.memory_space<vmem>>, vector<1x1x128xf32>
      %39 = vector.shape_cast %38 : vector<1x1x128xf32> to vector<1x128xf32>
      %40 = vector.shape_cast %37 : vector<1x128xf32> to vector<1x1x128xf32>
      tpu.vector_store %arg5[%c0_28, %c0_29, %c0_30], %40 {strides = array<i32>} : memref<1x1x128xf32, #tpu.memory_space<vmem>>, vector<1x1x128xf32>,
      %c0_31 = arith.constant 0 : index
      %c0_32 = arith.constant 0 : index
      %41 = vector.load %arg8[%c0_31, %c0_32] : memref<8x128xi32, #tpu.memory_space<vmem>>, vector<8x128xi32>
      %cst_33 = arith.constant dense<0> : vector<128xi32>
      %42 = vector.multi_reduction <add>, %41, %cst_33 [0] : vector<8x128xi32> to vector<128xi32>
      %43 = vector.shape_cast %42 : vector<128xi32> to vector<1x128xi32>
      %c0_34 = arith.constant 0 : index
      %c0_35 = arith.constant 0 : index
      %c0_36 = arith.constant 0 : index
      %44 = vector.load %arg6[%c0_34, %c0_35, %c0_36] : memref<1x2x128xi32, #tpu.memory_space<vmem>>, vector<1x1x128xi32>
      %45 = vector.shape_cast %44 : vector<1x1x128xi32> to vector<1x128xi32>
      %46 = vector.shape_cast %43 : vector<1x128xi32> to vector<1x1x128xi32>
      tpu.vector_store %arg6[%c0_34, %c0_35, %c0_36], %46 {strides = array<i32>} : memref<1x2x128xi32, #tpu.memory_space<vmem>>, vector<1x1x128xi32>,
      %c0_37 = arith.constant 0 : index
      %c0_38 = arith.constant 0 : index
      %47 = vector.load %arg9[%c0_37, %c0_38] : memref<8x128xi32, #tpu.memory_space<vmem>>, vector<8x128xi32>
      %cst_39 = arith.constant dense<-2147483648> : vector<128xi32>
      %48 = vector.multi_reduction <maxsi>, %47, %cst_39 [0] : vector<8x128xi32> to vector<128xi32>
      %49 = vector.shape_cast %48 : vector<128xi32> to vector<1x128xi32>
      %c0_40 = arith.constant 0 : index
      %c1 = arith.constant 1 : index
      %c0_41 = arith.constant 0 : index
      %50 = vector.load %arg6[%c0_40, %c1, %c0_41] : memref<1x2x128xi32, #tpu.memory_space<vmem>>, vector<1x1x128xi32>
      %51 = vector.shape_cast %50 : vector<1x1x128xi32> to vector<1x128xi32>
      %52 = vector.shape_cast %49 : vector<1x128xi32> to vector<1x1x128xi32>
      tpu.vector_store %arg6[%c0_40, %c1, %c0_41], %52 {strides = array<i32>} : memref<1x2x128xi32, #tpu.memory_space<vmem>>, vector<1x1x128xi32>,
    } else {
    }
    return
  }
  func.func @transform_0(%arg0: i32, %arg1: i32) -> (i32, i32) {
    %c1_i32 = arith.constant 1 : i32
    %0 = arith.muli %arg0, %c1_i32 : i32
    %1 = arith.addi %0, %arg1 : i32
    %c0_i32 = arith.constant 0 : i32
    %2 = arith.minsi %1, %c0_i32 : i32
    %c0_i32_0 = arith.constant 0 : i32
    %c0_i32_1 = arith.constant 0 : i32
    return %2, %c0_i32_0 : i32, i32
  }
  func.func @transform_1(%arg0: i32, %arg1: i32) -> (i32, i32) {
    %c1_i32 = arith.constant 1 : i32
    %0 = arith.muli %arg0, %c1_i32 : i32
    %1 = arith.addi %0, %arg1 : i32
    %c0_i32 = arith.constant 0 : i32
    %2 = arith.minsi %1, %c0_i32 : i32
    %c0_i32_0 = arith.constant 0 : i32
    %c0_i32_1 = arith.constant 0 : i32
    return %2, %c0_i32_0 : i32, i32
  }
  func.func @transform_2(%arg0: i32, %arg1: i32) -> (i32, i32) {
    %c1_i32 = arith.constant 1 : i32
    %0 = arith.muli %arg0, %c1_i32 : i32
    %1 = arith.addi %0, %arg1 : i32
    %c0_i32 = arith.constant 0 : i32
    %2 = arith.minsi %1, %c0_i32 : i32
    %c0_i32_0 = arith.constant 0 : i32
    %c0_i32_1 = arith.constant 0 : i32
    return %2, %c0_i32_0 : i32, i32
  }
  func.func @transform_3(%arg0: i32, %arg1: i32) -> (i32, i32, i32) {
    %c0_i32 = arith.constant 0 : i32
    %c0_i32_0 = arith.constant 0 : i32
    %c0_i32_1 = arith.constant 0 : i32
    return %arg0, %c0_i32, %c0_i32_0 : i32, i32, i32
  }
  func.func @transform_4(%arg0: i32, %arg1: i32) -> (i32, i32, i32) {
    %c0_i32 = arith.constant 0 : i32
    %c0_i32_0 = arith.constant 0 : i32
    %c0_i32_1 = arith.constant 0 : i32
    return %arg0, %c0_i32, %c0_i32_0 : i32, i32, i32
  }
}

</mosaic_0001>

<llo_original>
// kernel: tpu_custom_call.1
$region0: #{tpu_custom_call.1}
  #allocation0 [shape = 'u32[]', space=smem, size = 0x4, offset = 0x4, fixed_abs, tag = 'smem constant byte address 0x4 - core index']
  #allocation1 [shape = 'u32[72,128]{1,0:T(1,128)}', space=vmem, size = 0x9000, scoped, tag = 'internal scratch']
  #allocation2 [shape = 'f32[8,128]{1,0:T(8,128)}', space=vmem, size = 0x1000, scoped, tag = 'scratch operand']
  #allocation3 [shape = 's32[8,128]{1,0:T(8,128)}', space=vmem, size = 0x1000, scoped, tag = 'scratch operand']
  #allocation4 [shape = 's32[8,128]{1,0:T(8,128)}', space=vmem, size = 0x1000, scoped, tag = 'scratch operand']
  %s0 = inlined_call_operand.hbm [shape: f32[16,128], index: 0, kind: input, shape index: {}]
  %s1 = inlined_call_operand.hbm [shape: f32[16,128], index: 1, kind: input, shape index: {}]
  %s2 = inlined_call_operand.hbm [shape: f32[16,128], index: 2, kind: input, shape index: {}]
  %s3 = inlined_call_operand.hbm [shape: f32[1,1,128], index: 3, kind: output, shape index: {0}]
  %s4 = inlined_call_operand.hbm [shape: s32[1,2,128], index: 4, kind: output, shape index: {1}]
  %5 = xla_tuple %s3, %s4
  %s6 = sld [smem:[#allocation0]]
  $region50: #{tpu_custom_call.1} parent=0
    _
  %s8 = ssub.s32 1, %s6
  %s9 = scalar_select 0, %s8, %s6
  $region1: #{tpu_custom_call.1} parent=0
    #allocation5 [shape = 'u8[8192]{0}', space=vmem, size = 0x2000, scoped, tag = 'input window, operand 0, single buffered']
    #allocation6 [shape = 's32[1]{0}', space=sflag, size = 0x4, scoped, tag = 'scoped memory for tpu_custom_call.1']
    #allocation7 [shape = 's32[1]{0}', space=sflag, size = 0x4, scoped, tag = 'scoped memory for tpu_custom_call.1']
    #allocation8 [shape = 'u8[8192]{0}', space=vmem, size = 0x2000, scoped, tag = 'input window, operand 1, single buffered']
    #allocation9 [shape = 's32[1]{0}', space=sflag, size = 0x4, scoped, tag = 'scoped memory for tpu_custom_call.1']
    #allocation10 [shape = 'u8[8192]{0}', space=vmem, size = 0x2000, scoped, tag = 'input window, operand 2, single buffered']
    #allocation11 [shape = 'u8[512]{0}', space=vmem, size = 0x400, scoped, tag = 'output window, operand 0, single buffered']
    #allocation12 [shape = 'u8[1024]{0}', space=vmem, size = 0x400, scoped, tag = 'output window, operand 1, single buffered']
    #allocation13 [shape = 's32[1]{0}', space=sflag, size = 0x4, scoped, tag = 'scoped memory for tpu_custom_call.1']
    %10 = vsyncpa [#allocation6], 0
    %11 = vsyncpa [#allocation9], 0
    %12 = vsyncpa [#allocation7], 0
    %13 = vsyncpa [#allocation13], 0
    // Predicated region
    $region2: #{tpu_custom_call.1} parent=1 // pred_check
      _
    $region3: #{tpu_custom_call.1} parent=1 // pred_check_branch
      %15 = sbr.rel (0) target = $region5
    $region4: #{tpu_custom_call.1} parent=1 // pred_region
      %s16 = sadd.s32 0, 0
      %p17 = scmp.lt.s32.totalorder %s16, 0
      %s18 = scalar_select %p17, %s16, 0
      %s19 = smul.u32 2, %s18
      %21 = vsyncadd [#allocation6], 0
      %s22 = smul.addr %s19, 8
      %s23 = scalar_lea.hbm %s0, %s22
      %s24 = sshll.u32 %s23, 4
      %s25 = int_to_ptr.hbm [resolvable:$true] %s24
      %s26 = sshll.u32 [#allocation5], 4
      %s27 = int_to_ptr.vmem [resolvable:$true] %s26
      %32 = dma.hbm_to_vmem [thread:$0]  %s25, 256, %s27, [#allocation6], 128, 128, 8
    $region5: #{tpu_custom_call.1} parent=1 // pred_fallthru
      _
    // Predicated region
    $region6: #{tpu_custom_call.1} parent=1 // pred_check
      _
    $region7: #{tpu_custom_call.1} parent=1 // pred_check_branch
      %34 = sbr.rel (0) target = $region9
    $region8: #{tpu_custom_call.1} parent=1 // pred_region
      %s35 = sadd.s32 0, 0
      %p36 = scmp.lt.s32.totalorder %s35, 0
      %s37 = scalar_select %p36, %s35, 0
      %s38 = smul.u32 2, %s37
      %40 = vsyncadd [#allocation9], 0
      %s41 = smul.addr %s38, 8
      %s42 = scalar_lea.hbm %s1, %s41
      %s43 = sshll.u32 %s42, 4
      %s44 = int_to_ptr.hbm [resolvable:$true] %s43
      %s45 = sshll.u32 [#allocation8], 4
      %s46 = int_to_ptr.vmem [resolvable:$true] %s45
      %51 = dma.hbm_to_vmem [thread:$0]  %s44, 256, %s46, [#allocation9], 128, 128, 8
    $region9: #{tpu_custom_call.1} parent=1 // pred_fallthru
      _
    // Predicated region
    $region10: #{tpu_custom_call.1} parent=1 // pred_check
      _
    $region11: #{tpu_custom_call.1} parent=1 // pred_check_branch
      %53 = sbr.rel (0) target = $region13
    $region12: #{tpu_custom_call.1} parent=1 // pred_region
      %s54 = sadd.s32 0, 0
      %p55 = scmp.lt.s32.totalorder %s54, 0
      %s56 = scalar_select %p55, %s54, 0
      %s57 = smul.u32 2, %s56
      %59 = vsyncadd [#allocation9], 0
      %s60 = smul.addr %s57, 8
      %s61 = scalar_lea.hbm %s2, %s60
      %s62 = sshll.u32 %s61, 4
      %s63 = int_to_ptr.hbm [resolvable:$true] %s62
      %s64 = sshll.u32 [#allocation10], 4
      %s65 = int_to_ptr.vmem [resolvable:$true] %s64
      %70 = dma.hbm_to_vmem [thread:$0]  %s63, 256, %s65, [#allocation9], 128, 128, 8
    $region13: #{tpu_custom_call.1} parent=1 // pred_fallthru
      _
    // Predicated region
    $region14: #{tpu_custom_call.1} parent=1 // pred_check
      _
    $region15: #{tpu_custom_call.1} parent=1 // pred_check_branch
      %72 = sbr.rel (0) target = $region17
    $region16: #{tpu_custom_call.1} parent=1 // pred_region
      %74 = dma.done [#allocation6], 256
    $region17: #{tpu_custom_call.1} parent=1 // pred_fallthru
      _
    // Predicated region
    $region18: #{tpu_custom_call.1} parent=1 // pred_check
      _
    $region19: #{tpu_custom_call.1} parent=1 // pred_check_branch
      %76 = sbr.rel (0) target = $region21
    $region20: #{tpu_custom_call.1} parent=1 // pred_region
      %78 = dma.done [#allocation9], 256
    $region21: #{tpu_custom_call.1} parent=1 // pred_fallthru
      _
    // Predicated region
    $region22: #{tpu_custom_call.1} parent=1 // pred_check
      _
    $region23: #{tpu_custom_call.1} parent=1 // pred_check_branch
      %80 = sbr.rel (0) target = $region25
    $region24: #{tpu_custom_call.1} parent=1 // pred_region
      %82 = dma.done [#allocation9], 256
    $region25: #{tpu_custom_call.1} parent=1 // pred_fallthru
      _
    %s83 = sadd.s32 0, 0
    %p84 = scmp.lt.s32.totalorder %s83, 0
    %s85 = scalar_select %p84, %s83, 0
    %s86 = smul.u32 2, %s85
    %s87 = sadd.s32 0, 0
    %p88 = scmp.lt.s32.totalorder %s87, 0
    %s89 = scalar_select %p88, %s87, 0
    %s90 = smul.u32 2, %s89
    %s91 = sadd.s32 0, 0
    %p92 = scmp.lt.s32.totalorder %s91, 0
    %s93 = scalar_select %p92, %s91, 0
    %s94 = smul.u32 2, %s93
    %p95 = scmp.eq.s32.totalorder 0, 0
    // Predicated region
    $region26: #{tpu_custom_call.1} parent=1 // pred_check
      %p96 = pneg %p95
    $region27: #{tpu_custom_call.1} parent=1 // pred_check_branch
      %98 = sbr.rel (%p96) target = $region29
    $region28: #{tpu_custom_call.1} parent=1 // pred_region
      %99 = vst [vmem:[#allocation2] sm:$0xff] 0.0
      %100 = vst [vmem:[#allocation3] sm:$0xff] 0
      %101 = vst [vmem:[#allocation4] sm:$0xff] 0
    $region29: #{tpu_custom_call.1} parent=1 // pred_fallthru
      _
    %v102 = vld [vmem:[#allocation5] sm:$0xff]
    %v103 = vld [vmem:[#allocation5 + $0x8] sm:$0xff]
    %v104 = vld [vmem:[#allocation8] sm:$0xff]
    %v105 = vld [vmem:[#allocation8 + $0x8] sm:$0xff]
    %v106 = vld [vmem:[#allocation10] sm:$0xff]
    %v107 = vld [vmem:[#allocation10 + $0x8] sm:$0xff]
    %v108 = vsub.f32 %v102, %v104
    %v109 = vsub.f32 %v103, %v105
    %v110 = vmul.f32 %v106, %v108
    %v111 = vmul.f32 %v107, %v109
    %v112 = vmul.f32 %v110, %v108
    %v113 = vmul.f32 %v111, %v109
    %vm114 = vcmp.gt.f32.partialorder %v106, 0.0
    %vm115 = vcmp.gt.f32.partialorder %v107, 0.0
    %vm116 = vcmp.ne.f32.partialorder %v112, 0.0
    %vm117 = vcmp.ne.f32.partialorder %v113, 0.0
    %v118 = vld [vmem:[#allocation2] sm:$0xff]
    %v119 = vsel %vm114, %v112, 0.0
    %v120 = vsel %vm115, %v113, 0.0
    %v121 = vadd.f32 %v119, %v120
    %v122 = vadd.f32 %v118, %v121
    %123 = vst [vmem:[#allocation2] sm:$0xff] %v122
    %v124 = vld [vmem:[#allocation3] sm:$0xff]
    %v125 = vsel %vm114, 1, 0
    %v126 = vsel %vm115, 1, 0
    %v127 = vadd.s32 %v125, %v126
    %v128 = vadd.s32 %v124, %v127
    %129 = vst [vmem:[#allocation3] sm:$0xff] %v128
    %v130 = vld [vmem:[#allocation4] sm:$0xff]
    %v131 = vsel %vm116, 1, 0
    %v132 = vsel %vm117, 1, 0
    %vm133 = vcmp.gt.s32.totalorder %v131, %v132
    %v134 = vsel %vm133, %v131, %v132
    %vm135 = vcmp.gt.s32.totalorder %v130, %v134
    %v136 = vsel %vm135, %v130, %v134
    %137 = vst [vmem:[#allocation4] sm:$0xff] %v136
    // Predicated region
    $region30: #{tpu_custom_call.1} parent=1 // pred_check
      %p138 = pneg %p95
    $region31: #{tpu_custom_call.1} parent=1 // pred_check_branch
      %140 = sbr.rel (%p138) target = $region33
    $region32: #{tpu_custom_call.1} parent=1 // pred_region
      %v141 = vld [vmem:[#allocation2] sm:$0xff]
      %v142 = vrot.slane %v141, 4
      %v143 = vadd.f32 %v141, %v142
      %v144 = vrot.slane %v143, 2
      %v145 = vadd.f32 %v143, %v144
      %v146 = vrot.slane %v145, 1
      %v147 = vadd.f32 %v145, %v146
      %148 = vst [vmem:[#allocation11] sm:$0x1] %v147
      %v149 = vld [vmem:[#allocation3] sm:$0xff]
      %v150 = vrot.slane %v149, 4
      %v151 = vadd.s32 %v149, %v150
      %v152 = vrot.slane %v151, 2
      %v153 = vadd.s32 %v151, %v152
      %v154 = vrot.slane %v153, 1
      %v155 = vadd.s32 %v153, %v154
      %156 = vst [vmem:[#allocation12] sm:$0x1] %v155
      %v157 = vld [vmem:[#allocation4] sm:$0xff]
      %v158 = vrot.slane %v157, 4
      %vm159 = vcmp.gt.s32.totalorder %v157, %v158
      %v160 = vsel %vm159, %v157, %v158
      %v161 = vrot.slane %v160, 2
      %vm162 = vcmp.gt.s32.totalorder %v160, %v161
      %v163 = vsel %vm162, %v160, %v161
      %v164 = vrot.slane %v163, 1
      %vm165 = vcmp.gt.s32.totalorder %v163, %v164
      %v166 = vsel %vm165, %v163, %v164
      %167 = vst [vmem:[#allocation12 + $0x1] sm:$0x1] %v166
    $region33: #{tpu_custom_call.1} parent=1 // pred_fallthru
      _
    // Predicated region
    $region34: #{tpu_custom_call.1} parent=1 // pred_check
      _
    $region35: #{tpu_custom_call.1} parent=1 // pred_check_branch
      %169 = sbr.rel (0) target = $region37
    $region36: #{tpu_custom_call.1} parent=1 // pred_region
      %171 = vsyncadd [#allocation7], 0
      %s173 = sshll.u32 [#allocation11], 4
      %s174 = int_to_ptr.vmem [resolvable:$true] %s173
      %s175 = sshll.u32 %s3, 4
      %s176 = int_to_ptr.hbm [resolvable:$true] %s175
      %178 = dma.vmem_to_hbm [thread:$0]  %s174, 16, %s176, [#allocation7]
    $region37: #{tpu_custom_call.1} parent=1 // pred_fallthru
      _
    // Predicated region
    $region38: #{tpu_custom_call.1} parent=1 // pred_check
      _
    $region39: #{tpu_custom_call.1} parent=1 // pred_check_branch
      %180 = sbr.rel (0) target = $region41
    $region40: #{tpu_custom_call.1} parent=1 // pred_region
      %182 = vsyncadd [#allocation13], 0
      %s184 = sshll.u32 [#allocation12], 4
      %s185 = int_to_ptr.vmem [resolvable:$true] %s184
      %s186 = sshll.u32 %s4, 4
      %s187 = int_to_ptr.hbm [resolvable:$true] %s186
      %189 = dma.vmem_to_hbm [thread:$0]  %s185, 32, %s187, [#allocation13]
    $region41: #{tpu_custom_call.1} parent=1 // pred_fallthru
      _
    // Predicated region
    $region42: #{tpu_custom_call.1} parent=1 // pred_check
      _
    $region43: #{tpu_custom_call.1} parent=1 // pred_check_branch
      %191 = sbr.rel (0) target = $region45
    $region44: #{tpu_custom_call.1} parent=1 // pred_region
      %193 = dma.done [#allocation7], 16
    $region45: #{tpu_custom_call.1} parent=1 // pred_fallthru
      _
    // Predicated region
    $region46: #{tpu_custom_call.1} parent=1 // pred_check
      _
    $region47: #{tpu_custom_call.1} parent=1 // pred_check_branch
      %195 = sbr.rel (0) target = $region49
    $region48: #{tpu_custom_call.1} parent=1 // pred_region
      %197 = dma.done [#allocation13], 32
    $region49: #{tpu_custom_call.1} parent=1 // pred_fallthru
      _
    %198 = vsyncpa [#allocation6], 1
    %199 = vsyncpa [#allocation9], 1
    %200 = vsyncpa [#allocation7], 1
    %201 = vsyncpa [#allocation13], 1

</llo_original>
